<compile_context>
chip_gen: v6e
topology: v6e:2x2x1
jax: 0.10.0
libtpu: 0.0.40
codegen_flags: <defaults>
</compile_context>

<pallas_src>
import numpy as np
import jax
import jax.numpy as jnp
from jax.experimental import pallas as pl
from jax.experimental.pallas import tpu as pltpu


def _round_up(x, m):
    return ((x + m - 1) // m) * m


# --------------------------------------------------------------------------
# Kernel: basis-major RBF.  Distances on lanes, radial-basis index on
# sublanes, so all math runs on fully lane-dense vregs.
# --------------------------------------------------------------------------
def _rbf_kernel_factory(cutoff):
    cutoff = float(cutoff)

    def kernel(d_ref, coef_ref, o_ref):
        # d_ref:    (1, T)       distances for this grid step
        # coef_ref: (n_rbf, 1)   n * pi / cutoff (resident across steps)
        # o_ref:    (n_rbf, T)
        d = d_ref[...]                                   # (1, T)
        coef = coef_ref[...]                             # (n_rbf, 1)

        # Per-distance quantities on the single (1, T) row before any
        # broadcast: exact divide (approx reciprocal misses the 1e-6 atol).
        is_zero = d == 0.0
        inv = 1.0 / jnp.where(is_zero, 1.0, d)           # (1, T)
        keep = d < cutoff                                # (1, T)

        # Lane-dense (n_rbf, T) math; coef / d / inv / masks broadcast
        # implicitly (one lane-broadcast + one sublane-broadcast).
        num = jnp.where(is_zero, coef, jnp.sin(coef * d))        # (n_rbf, T)
        o_ref[...] = jnp.where(keep, num * inv, 0.0).astype(o_ref.dtype)

    return kernel


# --------------------------------------------------------------------------
# Public wrapper (forward of PainnRadialBasis)
# --------------------------------------------------------------------------
def painn_radial_basis(dist, n_param, cutoff, *, tile_dists=32768,
                       lane_major_output=False):
    """dist: float distances of any shape.  n_param: (n_rbf,) `n` buffer/param.

    Returns dist.shape + (n_rbf,) float32 (matching the PyTorch module), or
    (n_rbf,) + dist.shape if lane_major_output=True (dense layout, no final
    transpose copy — intended for fused downstream consumers).
    """
    orig_shape = tuple(dist.shape)
    d = jnp.reshape(dist, (-1,)).astype(jnp.float32)
    n = int(d.shape[0])
    n_rbf = int(n_param.shape[0])
    coef = (n_param.astype(jnp.float32) * np.pi / float(cutoff)).reshape(n_rbf, 1)

    # Pad the flat distance vector to a multiple of 128 lanes (tiny copy).
    n_pad = _round_up(max(n, 1), 128)
    if n_pad != n:
        d = jnp.pad(d, (0, n_pad - n))
    d_row = d.reshape(1, n_pad)          # 8x sublane-padded in HBM; see header

    # T distances per grid step (multiple of 128).  Default 32768 -> 2 MiB
    # output block, ~6 MiB double-buffered VMEM at n_rbf=16.  Cap so the grid
    # keeps >= ~4 steps when possible (v7x megacore sharding).
    t = _round_up(min(max(int(tile_dists), 128), n_pad), 128)
    t = min(t, max(128, _round_up(pl.cdiv(n_pad, 4), 128)))
    grid = (pl.cdiv(n_pad, t),)          # ragged last block handled by Pallas

    out_t = pl.pallas_call(
        _rbf_kernel_factory(cutoff),
        out_shape=jax.ShapeDtypeStruct((n_rbf, n_pad), jnp.float32),
        grid_spec=pltpu.PrefetchScalarGridSpec(
            num_scalar_prefetch=0,
            grid=grid,
            in_specs=[
                pl.BlockSpec((1, t), lambda i: (0, i)),        # distances
                pl.BlockSpec((n_rbf, 1), lambda i: (0, 0)),    # resident coef
            ],
            out_specs=pl.BlockSpec((n_rbf, t), lambda i: (0, i)),
        ),
        compiler_params=pltpu.CompilerParams(
            dimension_semantics=("parallel",)),
    )(d_row, coef)

    if lane_major_output:
        return out_t[:, :n].reshape((n_rbf,) + orig_shape)

    # Module contract dist.shape + (n_rbf,): one XLA transpose copy
    # (the (N, n_rbf) array is lane-padded in HBM no matter who writes it).
    out = jnp.swapaxes(out_t, 0, 1)[:n]
    return out.reshape(orig_shape + (n_rbf,))


def painn_radial_basis_ref(dist, n_param, cutoff):
    """Pure-JAX reference mirroring the PyTorch forward."""
    shape_d = dist[..., None].astype(jnp.float32)
    coef = n_param.astype(jnp.float32) * np.pi / cutoff
    denom = jnp.where(shape_d == 0, 1.0, shape_d)
    num = jnp.where(shape_d == 0, coef, jnp.sin(coef * shape_d))
    return jnp.where(shape_d >= cutoff, 0.0, num / denom)


if __name__ == "__main__":
    key = jax.random.PRNGKey(0)
    cutoff = 5.0
    rtol, atol = 1e-5, 2e-6

    # ---- case 1: n_rbf=16, 1-D distances, tiny tile -> multi-step grid with
    #      a resident coef block; hits the d==0 and d>=cutoff branches.
    n_rbf = 16
    n_param = jnp.arange(1, n_rbf + 1, dtype=jnp.float32)   # as in __init__
    k1, k2 = jax.random.split(key)
    dist = jax.random.uniform(k1, (200,), minval=0.0, maxval=1.5 * cutoff)
    dist = dist.at[0].set(0.0).at[1].set(cutoff)

    out = jax.block_until_ready(
        painn_radial_basis(dist, n_param, cutoff, tile_dists=128))
    ref = painn_radial_basis_ref(dist, n_param, cutoff)
    np.testing.assert_allclose(np.asarray(out), np.asarray(ref),
                               rtol=rtol, atol=atol)

    # ---- case 2: multi-dim distances, default (large) tile.
    dist2 = jax.random.uniform(k2, (4, 50), minval=0.0, maxval=1.5 * cutoff)
    out2 = jax.block_until_ready(painn_radial_basis(dist2, n_param, cutoff))
    ref2 = painn_radial_basis_ref(dist2, n_param, cutoff)
    np.testing.assert_allclose(np.asarray(out2), np.asarray(ref2),
                               rtol=rtol, atol=atol)

    # ---- case 3: n_rbf=20 (does not divide 128) -> same lane-dense path.
    n_param3 = jnp.arange(1, 21, dtype=jnp.float32)
    out3 = jax.block_until_ready(painn_radial_basis(dist, n_param3, cutoff))
    ref3 = painn_radial_basis_ref(dist, n_param3, cutoff)
    np.testing.assert_allclose(np.asarray(out3), np.asarray(ref3),
                               rtol=rtol, atol=atol)

    # ---- case 4: lane-major output option (review item 3, option (b)).
    out4 = jax.block_until_ready(
        painn_radial_basis(dist2, n_param, cutoff, lane_major_output=True))
    ref4 = jnp.moveaxis(ref2, -1, 0)
    np.testing.assert_allclose(np.asarray(out4), np.asarray(ref4),
                               rtol=rtol, atol=atol)

    print("KERNEL_OK")
</pallas_src>

<mosaic_0001>
module attributes {stable_mosaic.version = 11 : i64} {
  func.func @kernel(%arg0: i32, %arg1: memref<1x128xf32, #tpu.memory_space<vmem>>, %arg2: memref<16x1xf32, #tpu.memory_space<vmem>>, %arg3: memref<16x128xf32, #tpu.memory_space<vmem>>) attributes {dimension_semantics = [#tpu.dimension_semantics<parallel>], iteration_bounds = array<i64: 2>, scalar_prefetch = 0 : i64, scratch_operands = 0 : i64, tpu.core_type = #tpu.core_type<tc>, window_params = [{transform_indices = @transform_0, window_bounds = array<i64: 1, 128>}, {pipeline_mode = #tpu.pipeline_mode<synchronous>, transform_indices = @transform_1, window_bounds = array<i64: 16, 1>}, {transform_indices = @transform_2, window_bounds = array<i64: 16, 128>}]} {
    %c0 = arith.constant 0 : index
    %c0_0 = arith.constant 0 : index
    %0 = vector.load %arg1[%c0, %c0_0] : memref<1x128xf32, #tpu.memory_space<vmem>>, vector<1x128xf32>
    %c0_1 = arith.constant 0 : index
    %c0_2 = arith.constant 0 : index
    %1 = vector.load %arg2[%c0_1, %c0_2] : memref<16x1xf32, #tpu.memory_space<vmem>>, vector<16x1xf32>
    %cst = arith.constant 0.000000e+00 : f32
    %2 = vector.broadcast %cst : f32 to vector<1x128xf32>
    %3 = arith.cmpf oeq, %0, %2 : vector<1x128xf32>
    %cst_3 = arith.constant 1.000000e+00 : f32
    %4 = vector.broadcast %cst_3 : f32 to vector<1x128xf32>
    %5 = arith.select %3, %4, %0 : vector<1x128xi1>, vector<1x128xf32>
    %cst_4 = arith.constant 1.000000e+00 : f32
    %6 = vector.broadcast %cst_4 : f32 to vector<1x128xf32>
    %7 = arith.divf %6, %5 : vector<1x128xf32>
    %cst_5 = arith.constant 5.000000e+00 : f32
    %8 = vector.broadcast %cst_5 : f32 to vector<1x128xf32>
    %9 = arith.cmpf olt, %0, %8 : vector<1x128xf32>
    %10 = vector.broadcast %1 : vector<16x1xf32> to vector<16x128xf32>
    %11 = vector.broadcast %0 : vector<1x128xf32> to vector<16x128xf32>
    %12 = arith.mulf %10, %11 : vector<16x128xf32>
    %13 = math.sin %12 : vector<16x128xf32>
    %14 = vector.shape_cast %3 : vector<1x128xi1> to vector<1x128xi1>
    %15 = vector.broadcast %14 : vector<1x128xi1> to vector<16x128xi1>
    %16 = vector.shape_cast %1 : vector<16x1xf32> to vector<16x1xf32>
    %17 = vector.broadcast %16 : vector<16x1xf32> to vector<16x128xf32>
    %18 = arith.select %15, %17, %13 : vector<16x128xi1>, vector<16x128xf32>
    %19 = vector.broadcast %7 : vector<1x128xf32> to vector<16x128xf32>
    %20 = arith.mulf %18, %19 : vector<16x128xf32>
    %cst_6 = arith.constant 0.000000e+00 : f32
    %21 = vector.shape_cast %9 : vector<1x128xi1> to vector<1x128xi1>
    %22 = vector.broadcast %21 : vector<1x128xi1> to vector<16x128xi1>
    %23 = vector.broadcast %cst_6 : f32 to vector<16x128xf32>
    %24 = arith.select %22, %20, %23 : vector<16x128xi1>, vector<16x128xf32>
    %c0_7 = arith.constant 0 : index
    %c0_8 = arith.constant 0 : index
    %25 = vector.load %arg3[%c0_7, %c0_8] : memref<16x128xf32, #tpu.memory_space<vmem>>, vector<16x128xf32>
    tpu.vector_store %arg3[%c0_7, %c0_8], %24 {strides = array<i32>} : memref<16x128xf32, #tpu.memory_space<vmem>>, vector<16x128xf32>,
    return
  }
  func.func @transform_0(%arg0: i32) -> (i32, i32) {
    %c0_i32 = arith.constant 0 : i32
    %c0_i32_0 = arith.constant 0 : i32
    return %c0_i32, %arg0 : i32, i32
  }
  func.func @transform_1(%arg0: i32) -> (i32, i32) {
    %c0_i32 = arith.constant 0 : i32
    %c0_i32_0 = arith.constant 0 : i32
    %c0_i32_1 = arith.constant 0 : i32
    return %c0_i32, %c0_i32_0 : i32, i32
  }
  func.func @transform_2(%arg0: i32) -> (i32, i32) {
    %c0_i32 = arith.constant 0 : i32
    %c0_i32_0 = arith.constant 0 : i32
    return %c0_i32, %arg0 : i32, i32
  }
}

</mosaic_0001>

<llo_original>
// kernel: tpu_custom_call.1
$region0: #{tpu_custom_call.1}
  #allocation0 [shape = 'u32[]', space=smem, size = 0x4, offset = 0x4, fixed_abs, tag = 'smem constant byte address 0x4 - core index']
  #allocation1 [shape = 'u32[144,128]{1,0:T(1,128)}', space=vmem, size = 0x12000, scoped, tag = 'internal scratch']
  %s0 = inlined_call_operand.vmem [shape: f32[1,256], index: 0, kind: input, shape index: {}]
  %s1 = inlined_call_operand.vmem [shape: f32[16,1], index: 1, kind: input, shape index: {}]
  %s2 = inlined_call_operand.hbm [shape: f32[16,256], index: 2, kind: output, shape index: {}]
  %s3 = sld [smem:[#allocation0]]
  $region41: #{tpu_custom_call.1} parent=0
    _
  %s5 = ssub.s32 1, %s3
  %s6 = scalar_select 0, %s5, %s3
  $region1: #{tpu_custom_call.1} parent=0
    #allocation2 [shape = 'u8[16384]{0}', space=vmem, size = 0x4000, scoped, tag = 'output window, operand 0']
    #allocation3 [shape = 's32[2]{0}', space=sflag, size = 0x8, scoped, tag = 'scoped memory for tpu_custom_call.1']
    %7 = vsyncpa [#allocation3], 0
    %s8 = scalar_lea.sflag [#allocation3], 1
    %9 = vsyncpa %s8, 0
    loop: start=0, step=1, limit=4
    $region2: #{tpu_custom_call.1} parent=1 // loop_pre_header
      _
    $region3: #{tpu_custom_call.1} parent=1 // loop_header
      %s11 = sphi 0, %s15
      %p12 = scmp.ge.s32.totalorder %s11, 4
      %s21 = sphi 0, %s23
      %s24 = sphi 0, %s21
      %s25 = sphi 0, %s24
      %s41 = sphi 0, %s25
      %s45 = sphi 0, %s45
      %s47 = sphi 0, %s45
      %s48 = sphi 0, %s47
      %s62 = sphi 0, %s48
      %s68 = sphi 0, %s70
      %s71 = sphi 0, %s68
      %s72 = sphi 0, %s71
      %s88 = sphi 0, %s72
    $region4: #{tpu_custom_call.1} parent=1 // loop_header_branch
      %14 = sbr.rel (%p12) target = $region8
    $region5: #{tpu_custom_call.1} parent=1 // loop_body
      %s16 = ssub.s32 %s11, 1
      %s17 = ssub.s32 %s11, 2
      %s18 = sadd.s32 %s11, 1
      %s19 = ssub.s32 %s11, %s18
      %p20 = scmp.eq.s32.totalorder %s19, 0
      %s22 = sadd.s32 %s21, 1
      %s23 = scalar_select %p20, %s21, %s22
      %p26 = pneg %p20
      %p27 = scmp.eq.s32.totalorder %s11, 1
      %p28 = por %p26, %p27
      %p29 = scmp.ne.s32.totalorder %s21, %s24
      %p30 = scmp.eq.s32.totalorder %s11, 0
      %p31 = por %p29, %p30
      %p32 = scmp.ne.s32.totalorder %s21, %s24
      %p33 = scmp.eq.s32.totalorder %s16, 1
      %p34 = por %p32, %p33
      %p35 = scmp.ne.s32.totalorder %s24, %s25
      %p36 = scmp.eq.s32.totalorder %s16, 0
      %p37 = por %p35, %p36
      %p38 = scmp.ne.s32.totalorder %s24, %s25
      %p39 = scmp.eq.s32.totalorder %s17, 1
      %p40 = por %p38, %p39
      %p42 = scmp.ne.s32.totalorder %s25, %s41
      %p43 = scmp.eq.s32.totalorder %s17, 0
      %p44 = por %p42, %p43
      %s46 = sadd.s32 %s45, 1
      %p49 = scmp.eq.s32.totalorder %s11, 1
      %p50 = scmp.ne.s32.totalorder %s45, %s47
      %p51 = scmp.eq.s32.totalorder %s11, 0
      %p52 = por %p50, %p51
      %p53 = scmp.ne.s32.totalorder %s45, %s47
      %p54 = scmp.eq.s32.totalorder %s16, 1
      %p55 = por %p53, %p54
      %p56 = scmp.ne.s32.totalorder %s47, %s48
      %p57 = scmp.eq.s32.totalorder %s16, 0
      %p58 = por %p56, %p57
      %p59 = scmp.ne.s32.totalorder %s47, %s48
      %p60 = scmp.eq.s32.totalorder %s17, 1
      %p61 = por %p59, %p60
      %p63 = scmp.ne.s32.totalorder %s48, %s62
      %p64 = scmp.eq.s32.totalorder %s17, 0
      %p65 = por %p63, %p64
      %s66 = ssub.s32 %s11, %s18
      %p67 = scmp.eq.s32.totalorder %s66, 0
      %s69 = sadd.s32 %s68, 1
      %s70 = scalar_select %p67, %s68, %s69
      %p73 = pneg %p67
      %p74 = scmp.eq.s32.totalorder %s11, 1
      %p75 = por %p73, %p74
      %p76 = scmp.ne.s32.totalorder %s68, %s71
      %p77 = scmp.eq.s32.totalorder %s11, 0
      %p78 = por %p76, %p77
      %p79 = scmp.ne.s32.totalorder %s68, %s71
      %p80 = scmp.eq.s32.totalorder %s16, 1
      %p81 = por %p79, %p80
      %p82 = scmp.ne.s32.totalorder %s71, %s72
      %p83 = scmp.eq.s32.totalorder %s16, 0
      %p84 = por %p82, %p83
      %p85 = scmp.ne.s32.totalorder %s71, %s72
      %p86 = scmp.eq.s32.totalorder %s17, 1
      %p87 = por %p85, %p86
      %p89 = scmp.ne.s32.totalorder %s72, %s88
      %p90 = scmp.eq.s32.totalorder %s17, 0
      %p91 = por %p89, %p90
      %p92 = scmp.le.s32.totalorder 1, %s11
      %p93 = scmp.lt.s32.totalorder %s11, 3
      %p94 = pnand %p92, %p93
      %p95 = pneg %p94
      // Predicated region
      $region9: #{tpu_custom_call.1} parent=5 // pred_check
        _
      $region10: #{tpu_custom_call.1} parent=5 // pred_check_branch
        %97 = sbr.rel (%p94) target = $region12
      $region11: #{tpu_custom_call.1} parent=5 // pred_region
        %s98 = ssub.s32 %s11, 1
        // Predicated region
        $region13: #{tpu_custom_call.1} parent=11 // pred_check
          %p99 = pneg %p58
        $region14: #{tpu_custom_call.1} parent=11 // pred_check_branch
          %101 = sbr.rel (%p99) target = $region16
        $region15: #{tpu_custom_call.1} parent=11 // pred_region
          _
        $region16: #{tpu_custom_call.1} parent=11 // pred_fallthru
          _
      $region12: #{tpu_custom_call.1} parent=5 // pred_fallthru
        _
      %p102 = scmp.lt.s32.totalorder %s11, 2
      // Predicated region
      $region17: #{tpu_custom_call.1} parent=5 // pred_check
        %p103 = pneg %p102
      $region18: #{tpu_custom_call.1} parent=5 // pred_check_branch
        %105 = sbr.rel (%p103) target = $region20
      $region19: #{tpu_custom_call.1} parent=5 // pred_region
        // Predicated region
        $region21: #{tpu_custom_call.1} parent=19 // pred_check
          %p106 = pneg %p31
        $region22: #{tpu_custom_call.1} parent=19 // pred_check_branch
          %108 = sbr.rel (%p106) target = $region24
        $region23: #{tpu_custom_call.1} parent=19 // pred_region
          %p109 = scmp.lt.s32.totalorder %s11, 1
          %s110 = scalar_select %p109, %s11, 1
          %s111 = scalar_lea.vmem %s0, %s110
        $region24: #{tpu_custom_call.1} parent=19 // pred_fallthru
          _
      $region20: #{tpu_custom_call.1} parent=5 // pred_fallthru
        _
      %p112 = scmp.le.s32.totalorder 1, %s11
      %p113 = scmp.lt.s32.totalorder %s11, 3
      %p114 = pnand %p112, %p113
      %p115 = pneg %p114
      // Predicated region
      $region25: #{tpu_custom_call.1} parent=5 // pred_check
        _
      $region26: #{tpu_custom_call.1} parent=5 // pred_check_branch
        %117 = sbr.rel (%p114) target = $region28
      $region27: #{tpu_custom_call.1} parent=5 // pred_region
        %s118 = ssub.s32 %s11, 1
        %p119 = scmp.lt.s32.totalorder %s16, 1
        %s120 = scalar_select %p119, %s16, 1
        %s121 = scalar_lea.vmem %s0, %s120
        %p122 = pneg %p37
        %p123 = pneg %p34
        %p124 = pneg %p58
        %p125 = pneg %p55
        %p126 = pneg %p84
        %p127 = pneg %p81
        %s128 = sand.u32 %s71, 1
        %s129 = scalar_lea.sflag [#allocation3], %s128
        %s130 = sand.u32 %s71, 1
        %s131 = smul.addr %s130, 16
        %s132 = scalar_lea.vmem [#allocation2], %s131
        %p133 = scmp.lt.s32.totalorder %s16, 1
        %s134 = scalar_select %p133, %s16, 1
        %s135 = scalar_lea.vmem %s0, %s134
        %v136 = vld [vmem:[%s135] sm:$0x1]
        %v137 = vld [vmem:[%s1] sm:$0xff]
        %v138 = vld [vmem:[%s1 + $0x8] sm:$0xff]
        %vm139 = vcmp.eq.f32.partialorder %v136, 0.0
        %v140 = vsel %vm139, 1.0, %v136
        %v141 = vrcp.pop %v140
        %v142 = vmul.f32 1.0, %v141
        %vm143 = vcmp.lt.f32.partialorder %v136, 5.0
        %145 = vset.pattern.permute.xlu0 0
        %146 = vperm.xlu0 %145, %v137
        %v147 = vpop.permute.xlu0 %146
        %150 = vset.pattern.permute.xlu0 0
        %151 = vperm.xlu0 %150, %v138
        %v152 = vpop.permute.xlu0 %151
        %v155 = vlaneseq
        %v156 = vshrl.u32 %v155, 7
        %v157 = vsub.s32 0, %v156
        %v158 = vrot.slane %v136, %v157
        %v160 = vmul.f32 %v147, %v158
        %v161 = vmul.f32 %v152, %v158
        %v162 = vand.u32 2147483647, %v160
        %vm163 = vcmp.le.f32.partialorder %v162, 0.7853982
        %vm164 = vcmp.lt.s32.totalorder %v160, 0
        %v165 = vand.u32 %v160, 2139095040
        %v166 = vshrl.u32 %v165, 23
        %v167 = vsub.s32 %v166, 127
        %v168 = vand.u32 2147483647, %v160
        %v169 = vand.u32 %v168, 8388607
        %v170 = vor.u32 %v169, 8388608
        %v171 = vsub.s32 0, %v170
        %v172 = vadd.s32 %v167, 1
        %vm173 = vcmp.gt.s32.totalorder %v172, 0
        %v174 = vsel %vm173, %v172, 0
        %v175 = vshrl.u32 %v174, 5
        %v176 = vand.u32 %v174, 31
        %v177 = vsub.s32 32, %v176
        %v178 = vshrl.u32 683565275, %v177
        %v179 = vshll.u32 683565275, %v176
        %v180 = vshrl.u32 2475754826, %v177
        %v181 = vor.u32 %v179, %v180
        %v182 = vshll.u32 2475754826, %v176
        %v183 = vshrl.u32 2131351028, %v177
        %v184 = vor.u32 %v182, %v183
        %v185 = vshll.u32 2131351028, %v176
        %v186 = vshrl.u32 2102212464, %v177
        %v187 = vor.u32 %v185, %v186
        %v188 = vshll.u32 2102212464, %v176
        %v189 = vshrl.u32 920167782, %v177
        %v190 = vor.u32 %v188, %v189
        %v191 = vshll.u32 920167782, %v176
        %v192 = vshrl.u32 1326507024, %v177
        %v193 = vor.u32 %v191, %v192
        %vm194 = vcmp.lt.s32.totalorder %v175, 1
        %vm195 = vcmp.lt.s32.totalorder %v175, 2
        %vm196 = vcmp.lt.s32.totalorder %v175, 3
        %vm197 = vcmp.lt.s32.totalorder %v175, 4
        %v198 = vsel %vm194, %v178, %v181
        %v199 = vsel %vm197, %v187, 2102212464
        %v200 = vsel %vm196, %v184, %v199
        %v201 = vsel %vm195, %v198, %v200
        %v202 = vsel %vm194, %v181, %v184
        %v203 = vsel %vm197, %v190, 920167782
        %v204 = vsel %vm196, %v187, %v203
        %v205 = vsel %vm195, %v202, %v204
        %v206 = vsel %vm194, %v184, %v187
        %v207 = vsel %vm197, %v193, 1326507024
        %v208 = vsel %vm196, %v190, %v207
        %v209 = vsel %vm195, %v206, %v208
        %v210 = vshll.u32 %v170, 8
        %v211 = vmul.u32.u64.compose %v210, %v209
        %v212 = vextract.low.u32 %v211
        %v213 = vextract.high.u32 %v211
        %v214 = vmul.u32.u64.compose %v210, %v205
        %v215 = vextract.low.u32 %v214
        %v216 = vextract.high.u32 %v214
        %v217 = vmul.u32 %v210, %v201
        %v218 = vadd.s32 %v213, %v215
        %vm219 = vc.u32 %v213, %v215
        %v220 = vadd.s32 %v216, 1
        %v221 = vsel %vm219, %v220, %v216
        %v222 = vadd.s32 %v217, %v221
        %v223 = vadd.s32 %v222, 536870912
        %v224 = vshrl.u32 %v223, 30
        %v225 = vshll.u32 %v224, 30
        %v226 = vsub.s32 %v222, %v225
        %vm227 = vcmp.lt.s32.totalorder %v226, 0
        %v228 = vsub.s32 0, %v226
        %v229 = vsel %vm227, %v228, %v226
        %v230 = vclz %v229
        %v231 = vsub.s32 %v230, 2
        %vm232 = vcmp.gt.s32.totalorder 0, %v231
        %v233 = vsel %vm232, 0, %v231
        %v234 = vsub.s32 32, %v233
        %v235 = vshll.u32 %v226, %v233
        %v236 = vshrl.u32 %v218, %v234
        %v237 = vor.u32 %v235, %v236
        %v238 = vsub.s32 4294967266, %v233
        %v239 = vadd.s32 %v238, 127
        %v240 = vshll.u32 %v239, 23
        %v241 = vor.u32 4788187, %v240
        %v242 = vand.u32 2147483647, %v241
        %v244 = vcvt.s32.f32 %v237
        %v245 = vmul.f32 %v244, %v242
        %v246 = vxor.u32 %v245, 2147483648
        %v247 = vsel %vm164, %v246, %v245
        %v248 = vsub.s32 4, %v224
        %v249 = vsel %vm164, %v248, %v224
        %v250 = vsel %vm163, %v160, %v247
        %v251 = vsel %vm163, 0, %v249
        %v252 = vcosq.f32.pop %v250
        %v253 = vsinq.f32.pop %v250
        %vm254 = vweird.f32 %v160
        %v255 = vadd.s32 %v251, 3
        %v256 = vand.u32 %v255, 3
        %vm257 = vcmp.lt.s32.totalorder %v256, 2
        %vm258 = vcmp.eq.s32.totalorder %v256, 0
        %v259 = vxor.u32 %v253, 2147483648
        %v260 = vsel %vm258, %v252, %v259
        %vm261 = vcmp.eq.s32.totalorder %v256, 2
        %v262 = vxor.u32 %v252, 2147483648
        %v263 = vsel %vm261, %v262, %v253
        %v264 = vsel %vm257, %v260, %v263
        %v265 = vsel %vm254, nan, %v264
        %v266 = vand.u32 2147483647, %v161
        %vm267 = vcmp.le.f32.partialorder %v266, 0.7853982
        %vm268 = vcmp.lt.s32.totalorder %v161, 0
        %v269 = vand.u32 %v161, 2139095040
        %v270 = vshrl.u32 %v269, 23
        %v271 = vsub.s32 %v270, 127
        %v272 = vand.u32 2147483647, %v161
        %v273 = vand.u32 %v272, 8388607
        %v274 = vor.u32 %v273, 8388608
        %v275 = vsub.s32 0, %v274
        %v276 = vadd.s32 %v271, 1
        %vm277 = vcmp.gt.s32.totalorder %v276, 0
        %v278 = vsel %vm277, %v276, 0
        %v279 = vshrl.u32 %v278, 5
        %v280 = vand.u32 %v278, 31
        %v281 = vsub.s32 32, %v280
        %v282 = vshrl.u32 683565275, %v281
        %v283 = vshll.u32 683565275, %v280
        %v284 = vshrl.u32 2475754826, %v281
        %v285 = vor.u32 %v283, %v284
        %v286 = vshll.u32 2475754826, %v280
        %v287 = vshrl.u32 2131351028, %v281
        %v288 = vor.u32 %v286, %v287
        %v289 = vshll.u32 2131351028, %v280
        %v290 = vshrl.u32 2102212464, %v281
        %v291 = vor.u32 %v289, %v290
        %v292 = vshll.u32 2102212464, %v280
        %v293 = vshrl.u32 920167782, %v281
        %v294 = vor.u32 %v292, %v293
        %v295 = vshll.u32 920167782, %v280
        %v296 = vshrl.u32 1326507024, %v281
        %v297 = vor.u32 %v295, %v296
        %vm298 = vcmp.lt.s32.totalorder %v279, 1
        %vm299 = vcmp.lt.s32.totalorder %v279, 2
        %vm300 = vcmp.lt.s32.totalorder %v279, 3
        %vm301 = vcmp.lt.s32.totalorder %v279, 4
        %v302 = vsel %vm298, %v282, %v285
        %v303 = vsel %vm301, %v291, 2102212464
        %v304 = vsel %vm300, %v288, %v303
        %v305 = vsel %vm299, %v302, %v304
        %v306 = vsel %vm298, %v285, %v288
        %v307 = vsel %vm301, %v294, 920167782
        %v308 = vsel %vm300, %v291, %v307
        %v309 = vsel %vm299, %v306, %v308
        %v310 = vsel %vm298, %v288, %v291
        %v311 = vsel %vm301, %v297, 1326507024
        %v312 = vsel %vm300, %v294, %v311
        %v313 = vsel %vm299, %v310, %v312
        %v314 = vshll.u32 %v274, 8
        %v315 = vmul.u32.u64.compose %v314, %v313
        %v316 = vextract.low.u32 %v315
        %v317 = vextract.high.u32 %v315
        %v318 = vmul.u32.u64.compose %v314, %v309
        %v319 = vextract.low.u32 %v318
        %v320 = vextract.high.u32 %v318
        %v321 = vmul.u32 %v314, %v305
        %v322 = vadd.s32 %v317, %v319
        %vm323 = vc.u32 %v317, %v319
        %v324 = vadd.s32 %v320, 1
        %v325 = vsel %vm323, %v324, %v320
        %v326 = vadd.s32 %v321, %v325
        %v327 = vadd.s32 %v326, 536870912
        %v328 = vshrl.u32 %v327, 30
        %v329 = vshll.u32 %v328, 30
        %v330 = vsub.s32 %v326, %v329
        %vm331 = vcmp.lt.s32.totalorder %v330, 0
        %v332 = vsub.s32 0, %v330
        %v333 = vsel %vm331, %v332, %v330
        %v334 = vclz %v333
        %v335 = vsub.s32 %v334, 2
        %vm336 = vcmp.gt.s32.totalorder 0, %v335
        %v337 = vsel %vm336, 0, %v335
        %v338 = vsub.s32 32, %v337
        %v339 = vshll.u32 %v330, %v337
        %v340 = vshrl.u32 %v322, %v338
        %v341 = vor.u32 %v339, %v340
        %v342 = vsub.s32 4294967266, %v337
        %v343 = vadd.s32 %v342, 127
        %v344 = vshll.u32 %v343, 23
        %v345 = vor.u32 4788187, %v344
        %v346 = vand.u32 2147483647, %v345
        %v348 = vcvt.s32.f32 %v341
        %v349 = vmul.f32 %v348, %v346
        %v350 = vxor.u32 %v349, 2147483648
        %v351 = vsel %vm268, %v350, %v349
        %v352 = vsub.s32 4, %v328
        %v353 = vsel %vm268, %v352, %v328
        %v354 = vsel %vm267, %v161, %v351
        %v355 = vsel %vm267, 0, %v353
        %v356 = vcosq.f32.pop %v354
        %v357 = vsinq.f32.pop %v354
        %vm358 = vweird.f32 %v161
        %v359 = vadd.s32 %v355, 3
        %v360 = vand.u32 %v359, 3
        %vm361 = vcmp.lt.s32.totalorder %v360, 2
        %vm362 = vcmp.eq.s32.totalorder %v360, 0
        %v363 = vxor.u32 %v357, 2147483648
        %v364 = vsel %vm362, %v356, %v363
        %vm365 = vcmp.eq.s32.totalorder %v360, 2
        %v366 = vxor.u32 %v356, 2147483648
        %v367 = vsel %vm365, %v366, %v357
        %v368 = vsel %vm361, %v364, %v367
        %v369 = vsel %vm358, nan, %v368
        %v370 = vsel %vm139, 1, 0
        %v371 = vlaneseq
        %v372 = vshrl.u32 %v371, 7
        %v373 = vsub.s32 0, %v372
        %v374 = vrot.slane %v370, %v373
        %vm375 = vcmp.eq.s32.totalorder %v374, 1
        %v376 = vsel %vm375, %v147, %v265
        %v377 = vsel %vm375, %v152, %v369
        %v379 = vlaneseq
        %v380 = vshrl.u32 %v379, 7
        %v381 = vsub.s32 0, %v380
        %v382 = vrot.slane %v142, %v381
        %v384 = vmul.f32 %v376, %v382
        %v385 = vmul.f32 %v377, %v382
        %v386 = vsel %vm143, 1, 0
        %v387 = vlaneseq
        %v388 = vshrl.u32 %v387, 7
        %v389 = vsub.s32 0, %v388
        %v390 = vrot.slane %v386, %v389
        %vm391 = vcmp.eq.s32.totalorder %v390, 1
        %v392 = vsel %vm391, %v384, 0.0
        %v393 = vsel %vm391, %v385, 0.0
        %394 = vst [vmem:[%s132] sm:$0xff] %v392
        %395 = vst [vmem:[%s132 + $0x8] sm:$0xff] %v393
        %s396 = sand.u32 %s71, 1
        %s397 = scalar_lea.sflag [#allocation3], %s396
        %s398 = sand.u32 %s71, 1
        %s399 = smul.addr %s398, 16
        %s400 = scalar_lea.vmem [#allocation2], %s399
        // Predicated region
        $region29: #{tpu_custom_call.1} parent=27 // pred_check
          %p401 = pneg %p81
        $region30: #{tpu_custom_call.1} parent=27 // pred_check_branch
          %403 = sbr.rel (%p401) target = $region32
        $region31: #{tpu_custom_call.1} parent=27 // pred_region
          %s405 = ssub.s32 256, 256
          %406 = vsyncadd %s397, %s405
          %s407 = smul.addr %s16, 128
          %s408 = scalar_lea.hbm %s2, %s407
          %s409 = sshll.u32 %s400, 4
          %s410 = int_to_ptr.vmem [resolvable:$true] %s409
          %415 = dma.vmem_to_hbm [thread:$0]  %s410, 256, %s408, %s397, 128, 256, 8
        $region32: #{tpu_custom_call.1} parent=27 // pred_fallthru
          _
      $region28: #{tpu_custom_call.1} parent=5 // pred_fallthru
        _
      %p416 = scmp.le.s32.totalorder 2, %s11
      // Predicated region
      $region33: #{tpu_custom_call.1} parent=5 // pred_check
        %p417 = pneg %p416
      $region34: #{tpu_custom_call.1} parent=5 // pred_check_branch
        %419 = sbr.rel (%p417) target = $region36
      $region35: #{tpu_custom_call.1} parent=5 // pred_region
        %s420 = ssub.s32 %s11, 2
        // Predicated region
        $region37: #{tpu_custom_call.1} parent=35 // pred_check
          %p421 = pneg %p87
        $region38: #{tpu_custom_call.1} parent=35 // pred_check_branch
          %423 = sbr.rel (%p421) target = $region40
        $region39: #{tpu_custom_call.1} parent=35 // pred_region
          %s424 = sand.u32 %s72, 1
          %s425 = scalar_lea.sflag [#allocation3], %s424
          %s426 = sand.u32 %s72, 1
          %s427 = smul.addr %s426, 16
          %s428 = scalar_lea.vmem [#allocation2], %s427
          %429 = dma.done %s425, 256
        $region40: #{tpu_custom_call.1} parent=35 // pred_fallthru
          _
      $region36: #{tpu_custom_call.1} parent=5 // pred_fallthru
        _
    $region6: #{tpu_custom_call.1} parent=1 // loop_footer
      %s15 = sadd.s32 1, %s11
    $region7: #{tpu_custom_call.1} parent=1 // loop_footer_branch
      %10 = sbr.rel target = $region3
    $region8: #{tpu_custom_call.1} parent=1 // loop_exit
      _
    %430 = vsyncpa [#allocation3], 1
    %s431 = scalar_lea.sflag [#allocation3], 1
    %432 = vsyncpa %s431, 1

</llo_original>
